<compile_context>
chip_gen: v5e
topology: v5e:2x2
jax: 0.10.0
libtpu: 0.0.40
codegen_flags: <defaults>
</compile_context>

<pallas_src>
import functools

import jax
import jax.numpy as jnp
from jax.experimental import pallas as pl
from jax.experimental.pallas import tpu as pltpu

EPSILON = 1e-08
LANE = 128


def _round_up(x, m):
    return ((x + m - 1) // m) * m


def _softplus(x):
    # Matches torch.nn.Softplus(beta=1, threshold=20): x if x > 20 else log1p(exp(x))
    return jnp.where(x > 20.0, x, jnp.log1p(jnp.exp(jnp.minimum(x, 20.0))))


def fcn_kernel(n_hidden_layers,
               x_ref, w0_ref, b0_ref, wh_ref, bh_ref,
               wmu_ref, bmu_ref, wsg_ref, bsg_ref,
               mu_ref, sigma_ref):
    # fcs: Linear + tanh   (x: [TB, N_INPUT] @ w0: [N_INPUT, H_pad])
    h = jnp.tanh(jnp.dot(x_ref[...], w0_ref[...],
                         preferred_element_type=jnp.float32) + b0_ref[...])

    # fch: (N_LAYERS - 1) x (Linear + tanh), weights packed as [L-1, H_pad, H_pad]
    for l in range(n_hidden_layers):
        h = jnp.tanh(jnp.dot(h, wh_ref[l],
                             preferred_element_type=jnp.float32) + bh_ref[l])

    # fce split into two lane-aligned heads: mu and softplus(sigma) + eps
    mu_ref[...] = (jnp.dot(h, wmu_ref[...],
                           preferred_element_type=jnp.float32) + bmu_ref[...])
    z = jnp.dot(h, wsg_ref[...],
                preferred_element_type=jnp.float32) + bsg_ref[...]
    sigma_ref[...] = _softplus(z) + EPSILON


def fcn_forward(x, params, n_output, tb_max=512):
    """params: flat list [w0, b0, wh_1, bh_1, ..., we, be]
    with weights as [in, out] and biases as [1, out] (torch Linear pre-transposed)."""
    n_hidden_layers = (len(params) - 4) // 2
    batch, n_input = x.shape
    n_hidden = params[0].shape[1]

    h_pad = _round_up(n_hidden, LANE)
    o_pad = _round_up(n_output, LANE)

    def pad2(a, rows, cols):
        return jnp.pad(a, ((0, rows - a.shape[0]), (0, cols - a.shape[1])))

    # --- lane-dense zero padding of parameters ---
    w0 = pad2(params[0], n_input, h_pad)
    b0 = pad2(params[1], 1, h_pad)

    if n_hidden_layers > 0:
        wh = jnp.stack([pad2(params[2 + 2 * i], h_pad, h_pad)
                        for i in range(n_hidden_layers)])
        bh = jnp.stack([pad2(params[3 + 2 * i], 1, h_pad)
                        for i in range(n_hidden_layers)])
    else:
        wh = jnp.zeros((1, h_pad, h_pad), jnp.float32)
        bh = jnp.zeros((1, 1, h_pad), jnp.float32)

    # Split the final layer into mu / sigma heads (lane-aligned from lane 0).
    we, be = params[-2], params[-1]
    w_mu = pad2(we[:, :n_output], h_pad, o_pad)
    b_mu = pad2(be[:, :n_output], 1, o_pad)
    w_sg = pad2(we[:, n_output:], h_pad, o_pad)
    b_sg = pad2(be[:, n_output:], 1, o_pad)

    # --- batch tiling ---
    tb = min(tb_max, _round_up(batch, 8))
    b_pad = _round_up(batch, tb)
    if b_pad != batch:
        x = jnp.pad(x, ((0, b_pad - batch), (0, 0)))
    grid = (b_pad // tb,)

    # Advisory cost estimate for XLA scheduling.
    flops = 2 * b_pad * (n_input * h_pad
                         + n_hidden_layers * h_pad * h_pad
                         + 2 * h_pad * o_pad)
    transcendentals = b_pad * ((1 + n_hidden_layers) * h_pad + 2 * o_pad)
    bytes_accessed = 4 * (x.size + w0.size + b0.size + wh.size + bh.size
                          + w_mu.size + b_mu.size + w_sg.size + b_sg.size
                          + 2 * b_pad * o_pad)

    kernel = functools.partial(fcn_kernel, n_hidden_layers)

    def pinned(shape):
        nd = len(shape)
        return pl.BlockSpec(shape, lambda i, _nd=nd: (0,) * _nd)

    mu_pad, sg_pad = pl.pallas_call(
        kernel,
        out_shape=(jax.ShapeDtypeStruct((b_pad, o_pad), jnp.float32),
                   jax.ShapeDtypeStruct((b_pad, o_pad), jnp.float32)),
        grid=grid,
        in_specs=[
            pl.BlockSpec((tb, n_input), lambda i: (i, 0)),   # x: batch-tiled
            pinned(w0.shape), pinned(b0.shape),              # first layer (resident)
            pinned(wh.shape), pinned(bh.shape),              # stacked hidden layers
            pinned(w_mu.shape), pinned(b_mu.shape),          # mu head
            pinned(w_sg.shape), pinned(b_sg.shape),          # sigma head
        ],
        out_specs=(pl.BlockSpec((tb, o_pad), lambda i: (i, 0)),
                   pl.BlockSpec((tb, o_pad), lambda i: (i, 0))),
        compiler_params=pltpu.CompilerParams(
            dimension_semantics=("parallel",)),
        cost_estimate=pl.CostEstimate(
            flops=flops,
            transcendentals=transcendentals,
            bytes_accessed=bytes_accessed),
    )(x, w0, b0, wh, bh, w_mu, b_mu, w_sg, b_sg)

    # Strip batch and lane padding.
    return mu_pad[:batch, :n_output], sg_pad[:batch, :n_output]


def init_params(key, n_input, n_output, n_hidden, n_layers):
    """Deterministic synthetic init.  Weights returned as [in, out] (already
    transposed relative to torch.nn.Linear's [out, in]); biases as [1, out]."""
    dims = [(n_input, n_hidden)] + [(n_hidden, n_hidden)] * (n_layers - 1) \
           + [(n_hidden, 2 * n_output)]
    params = []
    for (din, dout) in dims:
        key, kw, kb = jax.random.split(key, 3)
        bound = 1.0 / jnp.sqrt(jnp.float32(din))
        w = jax.random.uniform(kw, (din, dout), jnp.float32, -bound, bound)
        b = jax.random.uniform(kb, (1, dout), jnp.float32, -bound, bound)
        params += [w, b]
    return params


def reference_forward(x, params, n_output):
    """Pure-JAX reference for sanity checking."""
    h = x
    n_pairs = len(params) // 2
    for i in range(n_pairs - 1):
        h = jnp.tanh(h @ params[2 * i] + params[2 * i + 1])
    out = h @ params[-2] + params[-1]
    mu = out[:, :n_output]
    sig_in = out[:, n_output:]
    sigma = jnp.where(sig_in > 20.0, sig_in,
                      jnp.log1p(jnp.exp(jnp.minimum(sig_in, 20.0)))) + EPSILON
    return mu, sigma


if __name__ == "__main__":
    # Small shapes consistent with the module's forward (x: [batch, N_INPUT]).
    N_INPUT, N_OUTPUT, N_HIDDEN, N_LAYERS = 4, 2, 32, 3
    BATCH = 8

    key = jax.random.PRNGKey(0)
    key, kx = jax.random.split(key)
    x = jax.random.normal(kx, (BATCH, N_INPUT), jnp.float32)

    params = init_params(key, N_INPUT, N_OUTPUT, N_HIDDEN, N_LAYERS)

    mu, sigma = fcn_forward(x, params, N_OUTPUT)
    mu, sigma = jax.block_until_ready(mu), jax.block_until_ready(sigma)

    mu_ref, sigma_ref = reference_forward(x, params, N_OUTPUT)
    assert mu.shape == (BATCH, N_OUTPUT) and sigma.shape == (BATCH, N_OUTPUT)
    assert jnp.allclose(mu, mu_ref, atol=1e-5), "mu mismatch"
    assert jnp.allclose(sigma, sigma_ref, atol=1e-5), "sigma mismatch"
    assert bool(jnp.all(sigma > 0)), "sigma must be positive"

    print("KERNEL_OK")
</pallas_src>

<mosaic_0001>
module attributes {stable_mosaic.version = 11 : i64} {
  func.func @fcn_kernel(%arg0: i32, %arg1: memref<8x4xf32, #tpu.memory_space<vmem>>, %arg2: memref<4x128xf32, #tpu.memory_space<vmem>>, %arg3: memref<1x128xf32, #tpu.memory_space<vmem>>, %arg4: memref<2x128x128xf32, #tpu.memory_space<vmem>>, %arg5: memref<2x1x128xf32, #tpu.memory_space<vmem>>, %arg6: memref<128x128xf32, #tpu.memory_space<vmem>>, %arg7: memref<1x128xf32, #tpu.memory_space<vmem>>, %arg8: memref<128x128xf32, #tpu.memory_space<vmem>>, %arg9: memref<1x128xf32, #tpu.memory_space<vmem>>, %arg10: memref<8x128xf32, #tpu.memory_space<vmem>>, %arg11: memref<8x128xf32, #tpu.memory_space<vmem>>) attributes {dimension_semantics = [#tpu.dimension_semantics<parallel>], iteration_bounds = array<i64: 1>, scalar_prefetch = 0 : i64, scratch_operands = 0 : i64, tpu.core_type = #tpu.core_type<tc>, window_params = [{transform_indices = @transform_0, window_bounds = array<i64: 8, 4>}, {pipeline_mode = #tpu.pipeline_mode<synchronous>, transform_indices = @transform_1, window_bounds = array<i64: 4, 128>}, {pipeline_mode = #tpu.pipeline_mode<synchronous>, transform_indices = @transform_2, window_bounds = array<i64: 1, 128>}, {pipeline_mode = #tpu.pipeline_mode<synchronous>, transform_indices = @transform_3, window_bounds = array<i64: 2, 128, 128>}, {pipeline_mode = #tpu.pipeline_mode<synchronous>, transform_indices = @transform_4, window_bounds = array<i64: 2, 1, 128>}, {pipeline_mode = #tpu.pipeline_mode<synchronous>, transform_indices = @transform_5, window_bounds = array<i64: 128, 128>}, {pipeline_mode = #tpu.pipeline_mode<synchronous>, transform_indices = @transform_6, window_bounds = array<i64: 1, 128>}, {pipeline_mode = #tpu.pipeline_mode<synchronous>, transform_indices = @transform_7, window_bounds = array<i64: 128, 128>}, {pipeline_mode = #tpu.pipeline_mode<synchronous>, transform_indices = @transform_8, window_bounds = array<i64: 1, 128>}, {transform_indices = @transform_9, window_bounds = array<i64: 8, 128>}, {transform_indices = @transform_10, window_bounds = array<i64: 8, 128>}]} {
    %c0 = arith.constant 0 : index
    %c0_0 = arith.constant 0 : index
    %0 = vector.load %arg1[%c0, %c0_0] : memref<8x4xf32, #tpu.memory_space<vmem>>, vector<8x4xf32>
    %c0_1 = arith.constant 0 : index
    %c0_2 = arith.constant 0 : index
    %1 = vector.load %arg2[%c0_1, %c0_2] : memref<4x128xf32, #tpu.memory_space<vmem>>, vector<4x128xf32>
    %cst = arith.constant dense<0.000000e+00> : vector<8x128xf32>
    %2 = tpu.matmul %0, %1, %cst {dimension_numbers = #tpu.dot_dimension_numbers<[1], [0], [0], [1], [0, 0, 1, 1], [], []>} : vector<8x4xf32>, vector<4x128xf32>, vector<8x128xf32> -> vector<8x128xf32>
    %c0_3 = arith.constant 0 : index
    %c0_4 = arith.constant 0 : index
    %3 = vector.load %arg3[%c0_3, %c0_4] : memref<1x128xf32, #tpu.memory_space<vmem>>, vector<1x128xf32>
    %4 = vector.broadcast %3 : vector<1x128xf32> to vector<8x128xf32>
    %5 = arith.addf %2, %4 : vector<8x128xf32>
    %6 = math.tanh %5 : vector<8x128xf32>
    %c0_5 = arith.constant 0 : index
    %c0_6 = arith.constant 0 : index
    %c0_7 = arith.constant 0 : index
    %7 = vector.load %arg4[%c0_5, %c0_6, %c0_7] : memref<2x128x128xf32, #tpu.memory_space<vmem>>, vector<1x128x128xf32>
    %8 = vector.shape_cast %7 : vector<1x128x128xf32> to vector<128x128xf32>
    %cst_8 = arith.constant dense<0.000000e+00> : vector<8x128xf32>
    %9 = tpu.matmul %6, %8, %cst_8 {dimension_numbers = #tpu.dot_dimension_numbers<[1], [0], [0], [1], [0, 0, 1, 1], [], []>} : vector<8x128xf32>, vector<128x128xf32>, vector<8x128xf32> -> vector<8x128xf32>
    %c0_9 = arith.constant 0 : index
    %c0_10 = arith.constant 0 : index
    %c0_11 = arith.constant 0 : index
    %10 = vector.load %arg5[%c0_9, %c0_10, %c0_11] : memref<2x1x128xf32, #tpu.memory_space<vmem>>, vector<1x1x128xf32>
    %11 = vector.shape_cast %10 : vector<1x1x128xf32> to vector<1x128xf32>
    %12 = vector.broadcast %11 : vector<1x128xf32> to vector<8x128xf32>
    %13 = arith.addf %9, %12 : vector<8x128xf32>
    %14 = math.tanh %13 : vector<8x128xf32>
    %c1 = arith.constant 1 : index
    %c0_12 = arith.constant 0 : index
    %c0_13 = arith.constant 0 : index
    %15 = vector.load %arg4[%c1, %c0_12, %c0_13] : memref<2x128x128xf32, #tpu.memory_space<vmem>>, vector<1x128x128xf32>
    %16 = vector.shape_cast %15 : vector<1x128x128xf32> to vector<128x128xf32>
    %cst_14 = arith.constant dense<0.000000e+00> : vector<8x128xf32>
    %17 = tpu.matmul %14, %16, %cst_14 {dimension_numbers = #tpu.dot_dimension_numbers<[1], [0], [0], [1], [0, 0, 1, 1], [], []>} : vector<8x128xf32>, vector<128x128xf32>, vector<8x128xf32> -> vector<8x128xf32>
    %c1_15 = arith.constant 1 : index
    %c0_16 = arith.constant 0 : index
    %c0_17 = arith.constant 0 : index
    %18 = vector.load %arg5[%c1_15, %c0_16, %c0_17] : memref<2x1x128xf32, #tpu.memory_space<vmem>>, vector<1x1x128xf32>
    %19 = vector.shape_cast %18 : vector<1x1x128xf32> to vector<1x128xf32>
    %20 = vector.broadcast %19 : vector<1x128xf32> to vector<8x128xf32>
    %21 = arith.addf %17, %20 : vector<8x128xf32>
    %22 = math.tanh %21 : vector<8x128xf32>
    %c0_18 = arith.constant 0 : index
    %c0_19 = arith.constant 0 : index
    %23 = vector.load %arg6[%c0_18, %c0_19] : memref<128x128xf32, #tpu.memory_space<vmem>>, vector<128x128xf32>
    %cst_20 = arith.constant dense<0.000000e+00> : vector<8x128xf32>
    %24 = tpu.matmul %22, %23, %cst_20 {dimension_numbers = #tpu.dot_dimension_numbers<[1], [0], [0], [1], [0, 0, 1, 1], [], []>} : vector<8x128xf32>, vector<128x128xf32>, vector<8x128xf32> -> vector<8x128xf32>
    %c0_21 = arith.constant 0 : index
    %c0_22 = arith.constant 0 : index
    %25 = vector.load %arg7[%c0_21, %c0_22] : memref<1x128xf32, #tpu.memory_space<vmem>>, vector<1x128xf32>
    %26 = vector.broadcast %25 : vector<1x128xf32> to vector<8x128xf32>
    %27 = arith.addf %24, %26 : vector<8x128xf32>
    %c0_23 = arith.constant 0 : index
    %c0_24 = arith.constant 0 : index
    %28 = vector.load %arg10[%c0_23, %c0_24] : memref<8x128xf32, #tpu.memory_space<vmem>>, vector<8x128xf32>
    tpu.vector_store %arg10[%c0_23, %c0_24], %27 {strides = array<i32>} : memref<8x128xf32, #tpu.memory_space<vmem>>, vector<8x128xf32>,
    %c0_25 = arith.constant 0 : index
    %c0_26 = arith.constant 0 : index
    %29 = vector.load %arg8[%c0_25, %c0_26] : memref<128x128xf32, #tpu.memory_space<vmem>>, vector<128x128xf32>
    %cst_27 = arith.constant dense<0.000000e+00> : vector<8x128xf32>
    %30 = tpu.matmul %22, %29, %cst_27 {dimension_numbers = #tpu.dot_dimension_numbers<[1], [0], [0], [1], [0, 0, 1, 1], [], []>} : vector<8x128xf32>, vector<128x128xf32>, vector<8x128xf32> -> vector<8x128xf32>
    %c0_28 = arith.constant 0 : index
    %c0_29 = arith.constant 0 : index
    %31 = vector.load %arg9[%c0_28, %c0_29] : memref<1x128xf32, #tpu.memory_space<vmem>>, vector<1x128xf32>
    %32 = vector.broadcast %31 : vector<1x128xf32> to vector<8x128xf32>
    %33 = arith.addf %30, %32 : vector<8x128xf32>
    %cst_30 = arith.constant 2.000000e+01 : f32
    %34 = vector.broadcast %cst_30 : f32 to vector<8x128xf32>
    %35 = arith.cmpf ogt, %33, %34 : vector<8x128xf32>
    %cst_31 = arith.constant 2.000000e+01 : f32
    %36 = vector.broadcast %cst_31 : f32 to vector<8x128xf32>
    %37 = arith.minimumf %33, %36 : vector<8x128xf32>
    %38 = math.exp %37 : vector<8x128xf32>
    %39 = math.log1p %38 : vector<8x128xf32>
    %40 = arith.select %35, %33, %39 : vector<8x128xi1>, vector<8x128xf32>
    %cst_32 = arith.constant 9.99999993E-9 : f32
    %41 = vector.broadcast %cst_32 : f32 to vector<8x128xf32>
    %42 = arith.addf %40, %41 : vector<8x128xf32>
    %c0_33 = arith.constant 0 : index
    %c0_34 = arith.constant 0 : index
    %43 = vector.load %arg11[%c0_33, %c0_34] : memref<8x128xf32, #tpu.memory_space<vmem>>, vector<8x128xf32>
    tpu.vector_store %arg11[%c0_33, %c0_34], %42 {strides = array<i32>} : memref<8x128xf32, #tpu.memory_space<vmem>>, vector<8x128xf32>,
    return
  }
  func.func @transform_0(%arg0: i32) -> (i32, i32) {
    %c0_i32 = arith.constant 0 : i32
    %c0_i32_0 = arith.constant 0 : i32
    return %arg0, %c0_i32 : i32, i32
  }
  func.func @transform_1(%arg0: i32) -> (i32, i32) {
    %c0_i32 = arith.constant 0 : i32
    %c0_i32_0 = arith.constant 0 : i32
    %c0_i32_1 = arith.constant 0 : i32
    return %c0_i32, %c0_i32_0 : i32, i32
  }
  func.func @transform_2(%arg0: i32) -> (i32, i32) {
    %c0_i32 = arith.constant 0 : i32
    %c0_i32_0 = arith.constant 0 : i32
    %c0_i32_1 = arith.constant 0 : i32
    return %c0_i32, %c0_i32_0 : i32, i32
  }
  func.func @transform_3(%arg0: i32) -> (i32, i32, i32) {
    %c0_i32 = arith.constant 0 : i32
    %c0_i32_0 = arith.constant 0 : i32
    %c0_i32_1 = arith.constant 0 : i32
    %c0_i32_2 = arith.constant 0 : i32
    return %c0_i32, %c0_i32_0, %c0_i32_1 : i32, i32, i32
  }
  func.func @transform_4(%arg0: i32) -> (i32, i32, i32) {
    %c0_i32 = arith.constant 0 : i32
    %c0_i32_0 = arith.constant 0 : i32
    %c0_i32_1 = arith.constant 0 : i32
    %c0_i32_2 = arith.constant 0 : i32
    return %c0_i32, %c0_i32_0, %c0_i32_1 : i32, i32, i32
  }
  func.func @transform_5(%arg0: i32) -> (i32, i32) {
    %c0_i32 = arith.constant 0 : i32
    %c0_i32_0 = arith.constant 0 : i32
    %c0_i32_1 = arith.constant 0 : i32
    return %c0_i32, %c0_i32_0 : i32, i32
  }
  func.func @transform_6(%arg0: i32) -> (i32, i32) {
    %c0_i32 = arith.constant 0 : i32
    %c0_i32_0 = arith.constant 0 : i32
    %c0_i32_1 = arith.constant 0 : i32
    return %c0_i32, %c0_i32_0 : i32, i32
  }
  func.func @transform_7(%arg0: i32) -> (i32, i32) {
    %c0_i32 = arith.constant 0 : i32
    %c0_i32_0 = arith.constant 0 : i32
    %c0_i32_1 = arith.constant 0 : i32
    return %c0_i32, %c0_i32_0 : i32, i32
  }
  func.func @transform_8(%arg0: i32) -> (i32, i32) {
    %c0_i32 = arith.constant 0 : i32
    %c0_i32_0 = arith.constant 0 : i32
    %c0_i32_1 = arith.constant 0 : i32
    return %c0_i32, %c0_i32_0 : i32, i32
  }
  func.func @transform_9(%arg0: i32) -> (i32, i32) {
    %c0_i32 = arith.constant 0 : i32
    %c0_i32_0 = arith.constant 0 : i32
    return %arg0, %c0_i32 : i32, i32
  }
  func.func @transform_10(%arg0: i32) -> (i32, i32) {
    %c0_i32 = arith.constant 0 : i32
    %c0_i32_0 = arith.constant 0 : i32
    return %arg0, %c0_i32 : i32, i32
  }
}

</mosaic_0001>

<llo_original>
// kernel: tpu_custom_call.1
$region0: #{tpu_custom_call.1}
  #allocation0 [shape = 'u32[]', space=smem, size = 0x4, offset = 0x4, fixed_abs, tag = 'smem constant byte address 0x4 - core index']
  #allocation1 [shape = 'u32[72,128]{1,0:T(1,128)}', space=vmem, size = 0x9000, scoped, tag = 'internal scratch']
  %s0 = inlined_call_operand.vmem [shape: f32[8,4], index: 0, kind: input, shape index: {}]
  %s1 = inlined_call_operand.vmem [shape: f32[4,128], index: 1, kind: input, shape index: {}]
  %s2 = inlined_call_operand.vmem [shape: f32[1,128], index: 2, kind: input, shape index: {}]
  %s3 = inlined_call_operand.hbm [shape: f32[2,128,128], index: 3, kind: input, shape index: {}]
  %s4 = inlined_call_operand.vmem [shape: f32[2,1,128], index: 4, kind: input, shape index: {}]
  %s5 = inlined_call_operand.hbm [shape: f32[128,128], index: 5, kind: input, shape index: {}]
  %s6 = inlined_call_operand.vmem [shape: f32[1,128], index: 6, kind: input, shape index: {}]
  %s7 = inlined_call_operand.hbm [shape: f32[128,128], index: 7, kind: input, shape index: {}]
  %s8 = inlined_call_operand.vmem [shape: f32[1,128], index: 8, kind: input, shape index: {}]
  %s9 = inlined_call_operand.hbm [shape: f32[8,128], index: 9, kind: output, shape index: {0}]
  %s10 = inlined_call_operand.hbm [shape: f32[8,128], index: 10, kind: output, shape index: {1}]
  %11 = xla_tuple %s9, %s10
  %s12 = sld [smem:[#allocation0]]
  $region66: #{tpu_custom_call.1} parent=0
    _
  %s14 = ssub.s32 1, %s12
  %s15 = scalar_select 0, %s14, %s12
  $region1: #{tpu_custom_call.1} parent=0
    #allocation2 [shape = 'u8[131072]{0}', space=vmem, size = 0x20000, scoped, tag = 'input window, operand 3, single buffered']
    #allocation3 [shape = 's32[1]{0}', space=sflag, size = 0x4, scoped, tag = 'scoped memory for tpu_custom_call.1']
    #allocation4 [shape = 's32[1]{0}', space=sflag, size = 0x4, scoped, tag = 'scoped memory for tpu_custom_call.1']
    #allocation5 [shape = 'u8[65536]{0}', space=vmem, size = 0x10000, scoped, tag = 'input window, operand 5, single buffered']
    #allocation6 [shape = 's32[1]{0}', space=sflag, size = 0x4, scoped, tag = 'scoped memory for tpu_custom_call.1']
    #allocation7 [shape = 'u8[65536]{0}', space=vmem, size = 0x10000, scoped, tag = 'input window, operand 7, single buffered']
    #allocation8 [shape = 'u8[4096]{0}', space=vmem, size = 0x1000, scoped, tag = 'output window, operand 0, single buffered']
    #allocation9 [shape = 'u8[4096]{0}', space=vmem, size = 0x1000, scoped, tag = 'output window, operand 1, single buffered']
    #allocation10 [shape = 's32[1]{0}', space=sflag, size = 0x4, scoped, tag = 'scoped memory for tpu_custom_call.1']
    %16 = vsyncpa [#allocation3], 0
    %17 = vsyncpa [#allocation6], 0
    %18 = vsyncpa [#allocation4], 0
    %19 = vsyncpa [#allocation10], 0
    // Predicated region
    $region2: #{tpu_custom_call.1} parent=1 // pred_check
      _
    $region3: #{tpu_custom_call.1} parent=1 // pred_check_branch
      %21 = sbr.rel (0) target = $region5
    $region4: #{tpu_custom_call.1} parent=1 // pred_region
      _
    $region5: #{tpu_custom_call.1} parent=1 // pred_fallthru
      _
    // Predicated region
    $region6: #{tpu_custom_call.1} parent=1 // pred_check
      _
    $region7: #{tpu_custom_call.1} parent=1 // pred_check_branch
      %23 = sbr.rel (0) target = $region9
    $region8: #{tpu_custom_call.1} parent=1 // pred_region
      _
    $region9: #{tpu_custom_call.1} parent=1 // pred_fallthru
      _
    // Predicated region
    $region10: #{tpu_custom_call.1} parent=1 // pred_check
      _
    $region11: #{tpu_custom_call.1} parent=1 // pred_check_branch
      %25 = sbr.rel (0) target = $region13
    $region12: #{tpu_custom_call.1} parent=1 // pred_region
      _
    $region13: #{tpu_custom_call.1} parent=1 // pred_fallthru
      _
    // Predicated region
    $region14: #{tpu_custom_call.1} parent=1 // pred_check
      _
    $region15: #{tpu_custom_call.1} parent=1 // pred_check_branch
      %27 = sbr.rel (0) target = $region17
    $region16: #{tpu_custom_call.1} parent=1 // pred_region
      %29 = vsyncadd [#allocation3], 0
      %s30 = sshll.u32 %s3, 4
      %s31 = int_to_ptr.hbm [resolvable:$true] %s30
      %s32 = sshll.u32 [#allocation2], 4
      %s33 = int_to_ptr.vmem [resolvable:$true] %s32
      %38 = dma.hbm_to_vmem [thread:$0]  %s31, 4096, %s33, [#allocation3], 128, 128, 8
    $region17: #{tpu_custom_call.1} parent=1 // pred_fallthru
      _
    // Predicated region
    $region18: #{tpu_custom_call.1} parent=1 // pred_check
      _
    $region19: #{tpu_custom_call.1} parent=1 // pred_check_branch
      %40 = sbr.rel (0) target = $region21
    $region20: #{tpu_custom_call.1} parent=1 // pred_region
      _
    $region21: #{tpu_custom_call.1} parent=1 // pred_fallthru
      _
    // Predicated region
    $region22: #{tpu_custom_call.1} parent=1 // pred_check
      _
    $region23: #{tpu_custom_call.1} parent=1 // pred_check_branch
      %42 = sbr.rel (0) target = $region25
    $region24: #{tpu_custom_call.1} parent=1 // pred_region
      %44 = vsyncadd [#allocation6], 0
      %s45 = sshll.u32 %s5, 4
      %s46 = int_to_ptr.hbm [resolvable:$true] %s45
      %s47 = sshll.u32 [#allocation5], 4
      %s48 = int_to_ptr.vmem [resolvable:$true] %s47
      %53 = dma.hbm_to_vmem [thread:$0]  %s46, 2048, %s48, [#allocation6], 128, 128, 8
    $region25: #{tpu_custom_call.1} parent=1 // pred_fallthru
      _
    // Predicated region
    $region26: #{tpu_custom_call.1} parent=1 // pred_check
      _
    $region27: #{tpu_custom_call.1} parent=1 // pred_check_branch
      %55 = sbr.rel (0) target = $region29
    $region28: #{tpu_custom_call.1} parent=1 // pred_region
      _
    $region29: #{tpu_custom_call.1} parent=1 // pred_fallthru
      _
    // Predicated region
    $region30: #{tpu_custom_call.1} parent=1 // pred_check
      _
    $region31: #{tpu_custom_call.1} parent=1 // pred_check_branch
      %57 = sbr.rel (0) target = $region33
    $region32: #{tpu_custom_call.1} parent=1 // pred_region
      %59 = vsyncadd [#allocation6], 0
      %s60 = sshll.u32 %s7, 4
      %s61 = int_to_ptr.hbm [resolvable:$true] %s60
      %s62 = sshll.u32 [#allocation7], 4
      %s63 = int_to_ptr.vmem [resolvable:$true] %s62
      %68 = dma.hbm_to_vmem [thread:$0]  %s61, 2048, %s63, [#allocation6], 128, 128, 8
    $region33: #{tpu_custom_call.1} parent=1 // pred_fallthru
      _
    // Predicated region
    $region34: #{tpu_custom_call.1} parent=1 // pred_check
      _
    $region35: #{tpu_custom_call.1} parent=1 // pred_check_branch
      %70 = sbr.rel (0) target = $region37
    $region36: #{tpu_custom_call.1} parent=1 // pred_region
      _
    $region37: #{tpu_custom_call.1} parent=1 // pred_fallthru
      _
    // Predicated region
    $region38: #{tpu_custom_call.1} parent=1 // pred_check
      _
    $region39: #{tpu_custom_call.1} parent=1 // pred_check_branch
      %72 = sbr.rel (0) target = $region41
    $region40: #{tpu_custom_call.1} parent=1 // pred_region
      %74 = dma.done [#allocation3], 4096
    $region41: #{tpu_custom_call.1} parent=1 // pred_fallthru
      _
    // Predicated region
    $region42: #{tpu_custom_call.1} parent=1 // pred_check
      _
    $region43: #{tpu_custom_call.1} parent=1 // pred_check_branch
      %76 = sbr.rel (0) target = $region45
    $region44: #{tpu_custom_call.1} parent=1 // pred_region
      %78 = dma.done [#allocation6], 2048
    $region45: #{tpu_custom_call.1} parent=1 // pred_fallthru
      _
    // Predicated region
    $region46: #{tpu_custom_call.1} parent=1 // pred_check
      _
    $region47: #{tpu_custom_call.1} parent=1 // pred_check_branch
      %80 = sbr.rel (0) target = $region49
    $region48: #{tpu_custom_call.1} parent=1 // pred_region
      %82 = dma.done [#allocation6], 2048
    $region49: #{tpu_custom_call.1} parent=1 // pred_fallthru
      _
    %v83 = vld [vmem:[%s0] sm:$0xff]
    %v84 = vld [vmem:[%s1] sm:$0xf]
    %v85 = vld [vmem:[%s2] sm:$0x1]
    %v87 = vperm.slane %v85, 0
    %vm89 = vcmask 31744
    %v91 = vsel %vm89, %v83, 0
    %vm93 = vcmask 1043456
    %v95 = vsel %vm93, %v84, 0
    %97 = vmatpush.msra.mxu0 0.0
    %98 = vmatpush.msra.mxu0 0.0
    %99 = vmatpush.msra.mxu0 0.0
    %100 = vmatpush.msra.mxu0 0.0
    %101 = vmatpush.msra.mxu0 0.0
    %102 = vmatpush.msra.mxu0 0.0
    %103 = vmatpush.msra.mxu0 0.0
    %104 = vmatpush.msra.mxu0 0.0
    %105 = vmatpush.msra.mxu0 0.0
    %106 = vmatpush.msra.mxu0 0.0
    %107 = vmatpush.msra.mxu0 0.0
    %108 = vmatpush.msra.mxu0 0.0
    %109 = vmatpush.msra.mxu0 0.0
    %110 = vmatpush.msra.mxu0 0.0
    %111 = vmatpush.msra.mxu0 0.0
    %112 = vmatpush.msra.mxu0 %v95
    %113 = vmatmul.f32.gmra.mxu0 %v91
    %v114 = vpop.f32.mrf.mxu0
    %v115 = vadd.f32 %v87, %v114
    %116 = vdwg.mxu0
    %v117 = vtanh.pop %v115
    %v118 = vld [vmem:[#allocation2] sm:$0xff]
    %v119 = vld [vmem:[#allocation2 + $0x8] sm:$0xff]
    %v120 = vld [vmem:[#allocation2 + $0x10] sm:$0xff]
    %v121 = vld [vmem:[#allocation2 + $0x18] sm:$0xff]
    %v122 = vld [vmem:[#allocation2 + $0x20] sm:$0xff]
    %v123 = vld [vmem:[#allocation2 + $0x28] sm:$0xff]
    %v124 = vld [vmem:[#allocation2 + $0x30] sm:$0xff]
    %v125 = vld [vmem:[#allocation2 + $0x38] sm:$0xff]
    %v126 = vld [vmem:[#allocation2 + $0x40] sm:$0xff]
    %v127 = vld [vmem:[#allocation2 + $0x48] sm:$0xff]
    %v128 = vld [vmem:[#allocation2 + $0x50] sm:$0xff]
    %v129 = vld [vmem:[#allocation2 + $0x58] sm:$0xff]
    %v130 = vld [vmem:[#allocation2 + $0x60] sm:$0xff]
    %v131 = vld [vmem:[#allocation2 + $0x68] sm:$0xff]
    %v132 = vld [vmem:[#allocation2 + $0x70] sm:$0xff]
    %v133 = vld [vmem:[#allocation2 + $0x78] sm:$0xff]
    %v134 = vld [vmem:[%s4] sm:$0x1]
    %v136 = vperm.slane %v134, 0
    %138 = vmatpush.msra.mxu0 %v133
    %139 = vmatpush.msra.mxu0 %v132
    %140 = vmatpush.msra.mxu0 %v131
    %141 = vmatpush.msra.mxu0 %v130
    %142 = vmatpush.msra.mxu0 %v129
    %143 = vmatpush.msra.mxu0 %v128
    %144 = vmatpush.msra.mxu0 %v127
    %145 = vmatpush.msra.mxu0 %v126
    %146 = vmatpush.msra.mxu0 %v125
    %147 = vmatpush.msra.mxu0 %v124
    %148 = vmatpush.msra.mxu0 %v123
    %149 = vmatpush.msra.mxu0 %v122
    %150 = vmatpush.msra.mxu0 %v121
    %151 = vmatpush.msra.mxu0 %v120
    %152 = vmatpush.msra.mxu0 %v119
    %153 = vmatpush.msra.mxu0 %v118
    %154 = vmatmul.f32.gmra.mxu0 %v117
    %v155 = vpop.f32.mrf.mxu0
    %v156 = vadd.f32 %v136, %v155
    %157 = vdwg.mxu0
    %v158 = vtanh.pop %v156
    %s159 = scalar_lea.vmem [#allocation2], 128
    %v160 = vld [vmem:[%s159] sm:$0xff]
    %v161 = vld [vmem:[%s159 + $0x8] sm:$0xff]
    %v162 = vld [vmem:[%s159 + $0x10] sm:$0xff]
    %v163 = vld [vmem:[%s159 + $0x18] sm:$0xff]
    %v164 = vld [vmem:[%s159 + $0x20] sm:$0xff]
    %v165 = vld [vmem:[%s159 + $0x28] sm:$0xff]
    %v166 = vld [vmem:[%s159 + $0x30] sm:$0xff]
    %v167 = vld [vmem:[%s159 + $0x38] sm:$0xff]
    %v168 = vld [vmem:[%s159 + $0x40] sm:$0xff]
    %v169 = vld [vmem:[%s159 + $0x48] sm:$0xff]
    %v170 = vld [vmem:[%s159 + $0x50] sm:$0xff]
    %v171 = vld [vmem:[%s159 + $0x58] sm:$0xff]
    %v172 = vld [vmem:[%s159 + $0x60] sm:$0xff]
    %v173 = vld [vmem:[%s159 + $0x68] sm:$0xff]
    %v174 = vld [vmem:[%s159 + $0x70] sm:$0xff]
    %v175 = vld [vmem:[%s159 + $0x78] sm:$0xff]
    %s176 = scalar_lea.vmem %s4, 1
    %v177 = vld [vmem:[%s176] sm:$0x1]
    %v179 = vperm.slane %v177, 0
    %181 = vmatpush.msra.mxu0 %v175
    %182 = vmatpush.msra.mxu0 %v174
    %183 = vmatpush.msra.mxu0 %v173
    %184 = vmatpush.msra.mxu0 %v172
    %185 = vmatpush.msra.mxu0 %v171
    %186 = vmatpush.msra.mxu0 %v170
    %187 = vmatpush.msra.mxu0 %v169
    %188 = vmatpush.msra.mxu0 %v168
    %189 = vmatpush.msra.mxu0 %v167
    %190 = vmatpush.msra.mxu0 %v166
    %191 = vmatpush.msra.mxu0 %v165
    %192 = vmatpush.msra.mxu0 %v164
    %193 = vmatpush.msra.mxu0 %v163
    %194 = vmatpush.msra.mxu0 %v162
    %195 = vmatpush.msra.mxu0 %v161
    %196 = vmatpush.msra.mxu0 %v160
    %197 = vmatmul.f32.gmra.mxu0 %v158
    %v198 = vpop.f32.mrf.mxu0
    %v199 = vadd.f32 %v179, %v198
    %200 = vdwg.mxu0
    %v201 = vtanh.pop %v199
    %v202 = vld [vmem:[#allocation5] sm:$0xff]
    %v203 = vld [vmem:[#allocation5 + $0x8] sm:$0xff]
    %v204 = vld [vmem:[#allocation5 + $0x10] sm:$0xff]
    %v205 = vld [vmem:[#allocation5 + $0x18] sm:$0xff]
    %v206 = vld [vmem:[#allocation5 + $0x20] sm:$0xff]
    %v207 = vld [vmem:[#allocation5 + $0x28] sm:$0xff]
    %v208 = vld [vmem:[#allocation5 + $0x30] sm:$0xff]
    %v209 = vld [vmem:[#allocation5 + $0x38] sm:$0xff]
    %v210 = vld [vmem:[#allocation5 + $0x40] sm:$0xff]
    %v211 = vld [vmem:[#allocation5 + $0x48] sm:$0xff]
    %v212 = vld [vmem:[#allocation5 + $0x50] sm:$0xff]
    %v213 = vld [vmem:[#allocation5 + $0x58] sm:$0xff]
    %v214 = vld [vmem:[#allocation5 + $0x60] sm:$0xff]
    %v215 = vld [vmem:[#allocation5 + $0x68] sm:$0xff]
    %v216 = vld [vmem:[#allocation5 + $0x70] sm:$0xff]
    %v217 = vld [vmem:[#allocation5 + $0x78] sm:$0xff]
    %v218 = vld [vmem:[%s6] sm:$0x1]
    %v220 = vperm.slane %v218, 0
    %222 = vmatpush.msra.mxu0 %v217
    %223 = vmatpush.msra.mxu0 %v216
    %224 = vmatpush.msra.mxu0 %v215
    %225 = vmatpush.msra.mxu0 %v214
    %226 = vmatpush.msra.mxu0 %v213
    %227 = vmatpush.msra.mxu0 %v212
    %228 = vmatpush.msra.mxu0 %v211
    %229 = vmatpush.msra.mxu0 %v210
    %230 = vmatpush.msra.mxu0 %v209
    %231 = vmatpush.msra.mxu0 %v208
    %232 = vmatpush.msra.mxu0 %v207
    %233 = vmatpush.msra.mxu0 %v206
    %234 = vmatpush.msra.mxu0 %v205
    %235 = vmatpush.msra.mxu0 %v204
    %236 = vmatpush.msra.mxu0 %v203
    %237 = vmatpush.msra.mxu0 %v202
    %238 = vmatmul.f32.gmra.mxu0 %v201
    %v239 = vpop.f32.mrf.mxu0
    %v240 = vadd.f32 %v220, %v239
    %241 = vdwg.mxu0
    %242 = vst [vmem:[#allocation8] sm:$0xff] %v240
    %v243 = vld [vmem:[#allocation7] sm:$0xff]
    %v244 = vld [vmem:[#allocation7 + $0x8] sm:$0xff]
    %v245 = vld [vmem:[#allocation7 + $0x10] sm:$0xff]
    %v246 = vld [vmem:[#allocation7 + $0x18] sm:$0xff]
    %v247 = vld [vmem:[#allocation7 + $0x20] sm:$0xff]
    %v248 = vld [vmem:[#allocation7 + $0x28] sm:$0xff]
    %v249 = vld [vmem:[#allocation7 + $0x30] sm:$0xff]
    %v250 = vld [vmem:[#allocation7 + $0x38] sm:$0xff]
    %v251 = vld [vmem:[#allocation7 + $0x40] sm:$0xff]
    %v252 = vld [vmem:[#allocation7 + $0x48] sm:$0xff]
    %v253 = vld [vmem:[#allocation7 + $0x50] sm:$0xff]
    %v254 = vld [vmem:[#allocation7 + $0x58] sm:$0xff]
    %v255 = vld [vmem:[#allocation7 + $0x60] sm:$0xff]
    %v256 = vld [vmem:[#allocation7 + $0x68] sm:$0xff]
    %v257 = vld [vmem:[#allocation7 + $0x70] sm:$0xff]
    %v258 = vld [vmem:[#allocation7 + $0x78] sm:$0xff]
    %v259 = vld [vmem:[%s8] sm:$0x1]
    %v261 = vperm.slane %v259, 0
    %263 = vmatpush.msra.mxu0 %v258
    %264 = vmatpush.msra.mxu0 %v257
    %265 = vmatpush.msra.mxu0 %v256
    %266 = vmatpush.msra.mxu0 %v255
    %267 = vmatpush.msra.mxu0 %v254
    %268 = vmatpush.msra.mxu0 %v253
    %269 = vmatpush.msra.mxu0 %v252
    %270 = vmatpush.msra.mxu0 %v251
    %271 = vmatpush.msra.mxu0 %v250
    %272 = vmatpush.msra.mxu0 %v249
    %273 = vmatpush.msra.mxu0 %v248
    %274 = vmatpush.msra.mxu0 %v247
    %275 = vmatpush.msra.mxu0 %v246
    %276 = vmatpush.msra.mxu0 %v245
    %277 = vmatpush.msra.mxu0 %v244
    %278 = vmatpush.msra.mxu0 %v243
    %279 = vmatmul.f32.gmra.mxu0 %v201
    %v280 = vpop.f32.mrf.mxu0
    %v281 = vadd.f32 %v261, %v280
    %282 = vdwg.mxu0
    %vm283 = vcmp.gt.f32.partialorder %v281, 20.0
    %v284 = vmin.f32 %v281, 20.0
    %v285 = vmul.f32 %v284, 1.442695
    %v286 = vpow.pop %v285
    %v287 = vadd.f32 %v286, 1.0
    %v288 = vlog2.pop %v287
    %v289 = vmul.f32 %v288, 0.6931472
    %v290 = vmul.f32 -0.5, %v286
    %v291 = vadd.f32 %v290, 1.0
    %v292 = vmul.f32 %v291, %v286
    %v293 = vand.u32 2147483647, %v286
    %vm294 = vcmp.lt.f32.partialorder %v293, 0.0004427343
    %v295 = vsel %vm294, %v292, %v289
    %v296 = vsel %vm283, %v281, %v295
    %v297 = vadd.f32 %v296, 1e-08
    %298 = vst [vmem:[#allocation9] sm:$0xff] %v297
    // Predicated region
    $region50: #{tpu_custom_call.1} parent=1 // pred_check
      _
    $region51: #{tpu_custom_call.1} parent=1 // pred_check_branch
      %300 = sbr.rel (0) target = $region53
    $region52: #{tpu_custom_call.1} parent=1 // pred_region
      %302 = vsyncadd [#allocation4], 0
      %s304 = sshll.u32 [#allocation8], 4
      %s305 = int_to_ptr.vmem [resolvable:$true] %s304
      %s306 = sshll.u32 %s9, 4
      %s307 = int_to_ptr.hbm [resolvable:$true] %s306
      %309 = dma.vmem_to_hbm [thread:$0]  %s305, 128, %s307, [#allocation4]
    $region53: #{tpu_custom_call.1} parent=1 // pred_fallthru
      _
    // Predicated region
    $region54: #{tpu_custom_call.1} parent=1 // pred_check
      _
    $region55: #{tpu_custom_call.1} parent=1 // pred_check_branch
      %311 = sbr.rel (0) target = $region57
    $region56: #{tpu_custom_call.1} parent=1 // pred_region
      %313 = vsyncadd [#allocation10], 0
      %s315 = sshll.u32 [#allocation9], 4
      %s316 = int_to_ptr.vmem [resolvable:$true] %s315
      %s317 = sshll.u32 %s10, 4
      %s318 = int_to_ptr.hbm [resolvable:$true] %s317
      %320 = dma.vmem_to_hbm [thread:$0]  %s316, 128, %s318, [#allocation10]
    $region57: #{tpu_custom_call.1} parent=1 // pred_fallthru
      _
    // Predicated region
    $region58: #{tpu_custom_call.1} parent=1 // pred_check
      _
    $region59: #{tpu_custom_call.1} parent=1 // pred_check_branch
      %322 = sbr.rel (0) target = $region61
    $region60: #{tpu_custom_call.1} parent=1 // pred_region
      %324 = dma.done [#allocation4], 128
    $region61: #{tpu_custom_call.1} parent=1 // pred_fallthru
      _
    // Predicated region
    $region62: #{tpu_custom_call.1} parent=1 // pred_check
      _
    $region63: #{tpu_custom_call.1} parent=1 // pred_check_branch
      %326 = sbr.rel (0) target = $region65
    $region64: #{tpu_custom_call.1} parent=1 // pred_region
      %328 = dma.done [#allocation10], 128
    $region65: #{tpu_custom_call.1} parent=1 // pred_fallthru
      _
    %329 = vsyncpa [#allocation3], 1
    %330 = vsyncpa [#allocation6], 1
    %331 = vsyncpa [#allocation4], 1
    %332 = vsyncpa [#allocation10], 1

</llo_original>
